<compile_context>
chip_gen: v6e
topology: v6e:2x2x1
jax: 0.10.0
libtpu: 0.0.40
codegen_flags: <defaults>
</compile_context>

<pallas_src>
import functools

import jax
import jax.numpy as jnp
from jax import lax
from jax.experimental import pallas as pl
from jax.experimental.pallas import tpu as pltpu

_LANE = 128
_SUBLANE = 8
# keep iff int32(bits) >= threshold  =>  P(keep) = 3435973837 / 2**32 ~= 0.8
_DROPOUT_KEEP_THRESHOLD = -1288490189
_DROPOUT_SCALE = 1.25  # 1 / (1 - 0.2)


def _round_up(x, m):
    return ((x + m - 1) // m) * m


def dqn_forward_kernel(x_ref, bits_ref,
                       w1_ref, b1_ref, w2_ref, b2_ref,
                       w3_ref, b3_ref, w4_ref, b4_ref,
                       out_ref, *, real_batch):
    x = x_ref[...]

    # fc1 + relu6
    h = jnp.dot(x, w1_ref[...], preferred_element_type=jnp.float32) + b1_ref[...]
    h = jnp.clip(h, 0.0, 6.0)

    # BatchNorm1d created inline in forward() -> training mode, affine params at
    # init values (weight=1, bias=0): normalize with biased batch statistics.
    # Statistics use only the real (non-padded) batch rows.
    row_ids = lax.broadcasted_iota(jnp.int32, h.shape, 0)
    row_mask = (row_ids < real_batch).astype(jnp.float32)
    inv_n = jnp.float32(1.0 / real_batch)
    mean = jnp.sum(h * row_mask, axis=0, keepdims=True) * inv_n
    centered = h - mean
    var = jnp.sum(centered * centered * row_mask, axis=0, keepdims=True) * inv_n
    h = centered * lax.rsqrt(var + jnp.float32(1e-5))

    # fc2 + relu6
    h = jnp.dot(h, w2_ref[...], preferred_element_type=jnp.float32) + b2_ref[...]
    h = jnp.clip(h, 0.0, 6.0)

    # fc3 + relu6
    h = jnp.dot(h, w3_ref[...], preferred_element_type=jnp.float32) + b3_ref[...]
    h = jnp.clip(h, 0.0, 6.0)

    # Dropout(p=0.2), training mode: keep w.p. 0.8, inverted scale 1/0.8.
    # Single integer compare fused with the scale (no int->float convert).
    keep_scale = jnp.where(bits_ref[...] >= jnp.int32(_DROPOUT_KEEP_THRESHOLD),
                           jnp.float32(_DROPOUT_SCALE), jnp.float32(0.0))
    h = h * keep_scale

    # fc4 -> action values (lane-padded to 128; real columns sliced outside).
    out_ref[...] = (jnp.dot(h, w4_ref[...], preferred_element_type=jnp.float32)
                    + b4_ref[...]).astype(out_ref.dtype)


def dqn_forward(state, params, key):
    """state: (B, input_dim) float; params: (w1,b1,w2,b2,w3,b3,w4,b4) with
    weights stored (in_features, out_features) and biases (1, out_features)."""
    w1, b1, w2, b2, w3, b3, w4, b4 = params
    B, in_dim = state.shape
    n_actions = w4.shape[1]

    # Pad batch to a multiple of 8 sublanes and all feature dims to 128 lanes.
    B_pad = max(_round_up(B, _SUBLANE), _SUBLANE)
    in_pad = _round_up(in_dim, _LANE)
    h1_pad = _round_up(w1.shape[1], _LANE)
    h2_pad = _round_up(w2.shape[1], _LANE)
    h3_pad = _round_up(w3.shape[1], _LANE)
    out_pad = _round_up(n_actions, _LANE)

    def pad2(a, rows, cols):
        a = a.astype(jnp.float32)
        return jnp.pad(a, ((0, rows - a.shape[0]), (0, cols - a.shape[1])))

    xp = pad2(state, B_pad, in_pad)
    w1p, b1p = pad2(w1, in_pad, h1_pad), pad2(b1, 1, h1_pad)
    w2p, b2p = pad2(w2, h1_pad, h2_pad), pad2(b2, 1, h2_pad)
    w3p, b3p = pad2(w3, h2_pad, h3_pad), pad2(b3, 1, h3_pad)
    w4p, b4p = pad2(w4, h3_pad, out_pad), pad2(b4, 1, out_pad)

    # Dropout randomness: raw uniform bits generated on the host side of the
    # kernel boundary (portable; no TPU-only PRNG primitive needed in-kernel).
    bits = lax.bitcast_convert_type(
        jax.random.bits(key, (B_pad, h3_pad), dtype=jnp.uint32), jnp.int32)

    kernel = functools.partial(dqn_forward_kernel, real_batch=B)
    vmem = pl.BlockSpec(memory_space=pltpu.MemorySpace.VMEM)

    out_padded = pl.pallas_call(
        kernel,
        out_shape=jax.ShapeDtypeStruct((B_pad, out_pad), jnp.float32),
        in_specs=[vmem] * 10,
        out_specs=vmem,
    )(xp, bits, w1p, b1p, w2p, b2p, w3p, b3p, w4p, b4p)

    return out_padded[:B, :n_actions]


def init_linear(key, fan_in, fan_out):
    """PyTorch nn.Linear default init: U(-1/sqrt(fan_in), 1/sqrt(fan_in)).
    Weight stored pre-transposed as (in, out) so the kernel does x @ W + b."""
    kw, kb = jax.random.split(key)
    bound = 1.0 / float(fan_in) ** 0.5
    w = jax.random.uniform(kw, (fan_in, fan_out), jnp.float32, -bound, bound)
    b = jax.random.uniform(kb, (1, fan_out), jnp.float32, -bound, bound)
    return w, b


if __name__ == "__main__":
    # Small hyper-params consistent with the PyTorch module's __init__.
    input_dims = (8,)
    fc1_dims, fc2_dims, fc3_dims = 32, 32, 32
    n_actions = 4
    batch = 4  # > 1 so the BatchNorm1d branch (len(x.size()) > 1) is exercised

    key = jax.random.PRNGKey(0)
    k_in, k_drop, k1, k2, k3, k4 = jax.random.split(key, 6)

    w1, b1 = init_linear(k1, input_dims[0], fc1_dims)
    w2, b2 = init_linear(k2, fc1_dims, fc2_dims)
    w3, b3 = init_linear(k3, fc2_dims, fc3_dims)
    w4, b4 = init_linear(k4, fc3_dims, n_actions)
    params = (w1, b1, w2, b2, w3, b3, w4, b4)

    state = jax.random.normal(k_in, (batch, input_dims[0]), jnp.float32)

    actions = dqn_forward(state, params, k_drop)
    jax.block_until_ready(actions)

    assert actions.shape == (batch, n_actions)
    assert actions.dtype == jnp.float32
    assert bool(jnp.all(jnp.isfinite(actions)))
    print("KERNEL_OK")
</pallas_src>

<mosaic_0001>
module attributes {stable_mosaic.version = 11 : i64} {
  func.func @dqn_forward_kernel(%arg0: memref<8x128xf32, #tpu.memory_space<vmem>>, %arg1: memref<8x128xi32, #tpu.memory_space<vmem>>, %arg2: memref<128x128xf32, #tpu.memory_space<vmem>>, %arg3: memref<1x128xf32, #tpu.memory_space<vmem>>, %arg4: memref<128x128xf32, #tpu.memory_space<vmem>>, %arg5: memref<1x128xf32, #tpu.memory_space<vmem>>, %arg6: memref<128x128xf32, #tpu.memory_space<vmem>>, %arg7: memref<1x128xf32, #tpu.memory_space<vmem>>, %arg8: memref<128x128xf32, #tpu.memory_space<vmem>>, %arg9: memref<1x128xf32, #tpu.memory_space<vmem>>, %arg10: memref<8x128xf32, #tpu.memory_space<vmem>>) attributes {dimension_semantics = [], scalar_prefetch = 0 : i64, scratch_operands = 0 : i64, tpu.core_type = #tpu.core_type<tc>} {
    %c0 = arith.constant 0 : index
    %c0_0 = arith.constant 0 : index
    %0 = vector.load %arg0[%c0, %c0_0] : memref<8x128xf32, #tpu.memory_space<vmem>>, vector<8x128xf32>
    %c0_1 = arith.constant 0 : index
    %c0_2 = arith.constant 0 : index
    %1 = vector.load %arg2[%c0_1, %c0_2] : memref<128x128xf32, #tpu.memory_space<vmem>>, vector<128x128xf32>
    %cst = arith.constant dense<0.000000e+00> : vector<8x128xf32>
    %2 = tpu.matmul %0, %1, %cst {dimension_numbers = #tpu.dot_dimension_numbers<[1], [0], [0], [1], [0, 0, 1, 1], [], []>} : vector<8x128xf32>, vector<128x128xf32>, vector<8x128xf32> -> vector<8x128xf32>
    %c0_3 = arith.constant 0 : index
    %c0_4 = arith.constant 0 : index
    %3 = vector.load %arg3[%c0_3, %c0_4] : memref<1x128xf32, #tpu.memory_space<vmem>>, vector<1x128xf32>
    %4 = vector.broadcast %3 : vector<1x128xf32> to vector<8x128xf32>
    %5 = arith.addf %2, %4 : vector<8x128xf32>
    %cst_5 = arith.constant 0.000000e+00 : f32
    %cst_6 = arith.constant 6.000000e+00 : f32
    %6 = vector.broadcast %cst_5 : f32 to vector<8x128xf32>
    %7 = arith.maximumf %6, %5 : vector<8x128xf32>
    %8 = vector.broadcast %cst_6 : f32 to vector<8x128xf32>
    %9 = arith.minimumf %8, %7 : vector<8x128xf32>
    %10 = tpu.iota {dimensions = array<i32: 0>} : vector<8x128xi32>
    %c4_i32 = arith.constant 4 : i32
    %11 = vector.broadcast %c4_i32 : i32 to vector<8x128xi32>
    %12 = arith.cmpi slt, %10, %11 : vector<8x128xi32>
    %13 = arith.extui %12 : vector<8x128xi1> to vector<8x128xi32>
    %14 = arith.sitofp %13 : vector<8x128xi32> to vector<8x128xf32>
    %15 = arith.mulf %9, %14 : vector<8x128xf32>
    %cst_7 = arith.constant dense<0.000000e+00> : vector<128xf32>
    %16 = vector.multi_reduction <add>, %15, %cst_7 [0] : vector<8x128xf32> to vector<128xf32>
    %17 = vector.shape_cast %16 : vector<128xf32> to vector<1x128xf32>
    %cst_8 = arith.constant 2.500000e-01 : f32
    %18 = vector.broadcast %cst_8 : f32 to vector<1x128xf32>
    %19 = arith.mulf %17, %18 : vector<1x128xf32>
    %20 = vector.broadcast %19 : vector<1x128xf32> to vector<8x128xf32>
    %21 = arith.subf %9, %20 : vector<8x128xf32>
    %22 = arith.mulf %21, %21 : vector<8x128xf32>
    %23 = arith.mulf %22, %14 : vector<8x128xf32>
    %cst_9 = arith.constant dense<0.000000e+00> : vector<128xf32>
    %24 = vector.multi_reduction <add>, %23, %cst_9 [0] : vector<8x128xf32> to vector<128xf32>
    %25 = vector.shape_cast %24 : vector<128xf32> to vector<1x128xf32>
    %cst_10 = arith.constant 2.500000e-01 : f32
    %26 = vector.broadcast %cst_10 : f32 to vector<1x128xf32>
    %27 = arith.mulf %25, %26 : vector<1x128xf32>
    %cst_11 = arith.constant 9.99999974E-6 : f32
    %28 = vector.broadcast %cst_11 : f32 to vector<1x128xf32>
    %29 = arith.addf %27, %28 : vector<1x128xf32>
    %30 = math.rsqrt %29 : vector<1x128xf32>
    %31 = vector.broadcast %30 : vector<1x128xf32> to vector<8x128xf32>
    %32 = arith.mulf %21, %31 : vector<8x128xf32>
    %c0_12 = arith.constant 0 : index
    %c0_13 = arith.constant 0 : index
    %33 = vector.load %arg4[%c0_12, %c0_13] : memref<128x128xf32, #tpu.memory_space<vmem>>, vector<128x128xf32>
    %cst_14 = arith.constant dense<0.000000e+00> : vector<8x128xf32>
    %34 = tpu.matmul %32, %33, %cst_14 {dimension_numbers = #tpu.dot_dimension_numbers<[1], [0], [0], [1], [0, 0, 1, 1], [], []>} : vector<8x128xf32>, vector<128x128xf32>, vector<8x128xf32> -> vector<8x128xf32>
    %c0_15 = arith.constant 0 : index
    %c0_16 = arith.constant 0 : index
    %35 = vector.load %arg5[%c0_15, %c0_16] : memref<1x128xf32, #tpu.memory_space<vmem>>, vector<1x128xf32>
    %36 = vector.broadcast %35 : vector<1x128xf32> to vector<8x128xf32>
    %37 = arith.addf %34, %36 : vector<8x128xf32>
    %cst_17 = arith.constant 0.000000e+00 : f32
    %cst_18 = arith.constant 6.000000e+00 : f32
    %38 = vector.broadcast %cst_17 : f32 to vector<8x128xf32>
    %39 = arith.maximumf %38, %37 : vector<8x128xf32>
    %40 = vector.broadcast %cst_18 : f32 to vector<8x128xf32>
    %41 = arith.minimumf %40, %39 : vector<8x128xf32>
    %c0_19 = arith.constant 0 : index
    %c0_20 = arith.constant 0 : index
    %42 = vector.load %arg6[%c0_19, %c0_20] : memref<128x128xf32, #tpu.memory_space<vmem>>, vector<128x128xf32>
    %cst_21 = arith.constant dense<0.000000e+00> : vector<8x128xf32>
    %43 = tpu.matmul %41, %42, %cst_21 {dimension_numbers = #tpu.dot_dimension_numbers<[1], [0], [0], [1], [0, 0, 1, 1], [], []>} : vector<8x128xf32>, vector<128x128xf32>, vector<8x128xf32> -> vector<8x128xf32>
    %c0_22 = arith.constant 0 : index
    %c0_23 = arith.constant 0 : index
    %44 = vector.load %arg7[%c0_22, %c0_23] : memref<1x128xf32, #tpu.memory_space<vmem>>, vector<1x128xf32>
    %45 = vector.broadcast %44 : vector<1x128xf32> to vector<8x128xf32>
    %46 = arith.addf %43, %45 : vector<8x128xf32>
    %cst_24 = arith.constant 0.000000e+00 : f32
    %cst_25 = arith.constant 6.000000e+00 : f32
    %47 = vector.broadcast %cst_24 : f32 to vector<8x128xf32>
    %48 = arith.maximumf %47, %46 : vector<8x128xf32>
    %49 = vector.broadcast %cst_25 : f32 to vector<8x128xf32>
    %50 = arith.minimumf %49, %48 : vector<8x128xf32>
    %c0_26 = arith.constant 0 : index
    %c0_27 = arith.constant 0 : index
    %51 = vector.load %arg1[%c0_26, %c0_27] : memref<8x128xi32, #tpu.memory_space<vmem>>, vector<8x128xi32>
    %c-1288490189_i32 = arith.constant -1288490189 : i32
    %52 = vector.broadcast %c-1288490189_i32 : i32 to vector<8x128xi32>
    %53 = arith.cmpi sge, %51, %52 : vector<8x128xi32>
    %cst_28 = arith.constant 1.250000e+00 : f32
    %cst_29 = arith.constant 0.000000e+00 : f32
    %54 = vector.broadcast %cst_28 : f32 to vector<8x128xf32>
    %55 = vector.broadcast %cst_29 : f32 to vector<8x128xf32>
    %56 = arith.select %53, %54, %55 : vector<8x128xi1>, vector<8x128xf32>
    %57 = arith.mulf %50, %56 : vector<8x128xf32>
    %c0_30 = arith.constant 0 : index
    %c0_31 = arith.constant 0 : index
    %58 = vector.load %arg8[%c0_30, %c0_31] : memref<128x128xf32, #tpu.memory_space<vmem>>, vector<128x128xf32>
    %cst_32 = arith.constant dense<0.000000e+00> : vector<8x128xf32>
    %59 = tpu.matmul %57, %58, %cst_32 {dimension_numbers = #tpu.dot_dimension_numbers<[1], [0], [0], [1], [0, 0, 1, 1], [], []>} : vector<8x128xf32>, vector<128x128xf32>, vector<8x128xf32> -> vector<8x128xf32>
    %c0_33 = arith.constant 0 : index
    %c0_34 = arith.constant 0 : index
    %60 = vector.load %arg9[%c0_33, %c0_34] : memref<1x128xf32, #tpu.memory_space<vmem>>, vector<1x128xf32>
    %61 = vector.broadcast %60 : vector<1x128xf32> to vector<8x128xf32>
    %62 = arith.addf %59, %61 : vector<8x128xf32>
    %c0_35 = arith.constant 0 : index
    %c0_36 = arith.constant 0 : index
    %63 = vector.load %arg10[%c0_35, %c0_36] : memref<8x128xf32, #tpu.memory_space<vmem>>, vector<8x128xf32>
    tpu.vector_store %arg10[%c0_35, %c0_36], %62 {strides = array<i32>} : memref<8x128xf32, #tpu.memory_space<vmem>>, vector<8x128xf32>,
    return
  }
}

</mosaic_0001>

<llo_original>
// kernel: tpu_custom_call.1
$region0: #{tpu_custom_call.1}
  #allocation0 [shape = 'u32[]', space=smem, size = 0x4, offset = 0x4, fixed_abs, tag = 'smem constant byte address 0x4 - core index']
  #allocation1 [shape = 'u32[144,128]{1,0:T(1,128)}', space=vmem, size = 0x12000, scoped, tag = 'internal scratch']
  %s0 = inlined_call_operand.hbm [shape: f32[8,128], index: 0, kind: input, shape index: {}]
  %s1 = inlined_call_operand.hbm [shape: s32[8,128], index: 1, kind: input, shape index: {}]
  %s2 = inlined_call_operand.hbm [shape: f32[128,128], index: 2, kind: input, shape index: {}]
  %s3 = inlined_call_operand.vmem [shape: f32[1,128], index: 3, kind: input, shape index: {}]
  %s4 = inlined_call_operand.hbm [shape: f32[128,128], index: 4, kind: input, shape index: {}]
  %s5 = inlined_call_operand.vmem [shape: f32[1,128], index: 5, kind: input, shape index: {}]
  %s6 = inlined_call_operand.hbm [shape: f32[128,128], index: 6, kind: input, shape index: {}]
  %s7 = inlined_call_operand.vmem [shape: f32[1,128], index: 7, kind: input, shape index: {}]
  %s8 = inlined_call_operand.hbm [shape: f32[128,128], index: 8, kind: input, shape index: {}]
  %s9 = inlined_call_operand.vmem [shape: f32[1,128], index: 9, kind: input, shape index: {}]
  %s10 = inlined_call_operand.hbm [shape: f32[8,128], index: 10, kind: output, shape index: {}]
  %s11 = sld [smem:[#allocation0]]
  $region74: #{tpu_custom_call.1} parent=0
    _
  %s13 = ssub.s32 1, %s11
  %s14 = scalar_select 0, %s13, %s11
  $region1: #{tpu_custom_call.1} parent=0
    #allocation2 [shape = 'u8[4096]{0}', space=vmem, size = 0x1000, scoped, tag = 'input window, operand 0, single buffered']
    #allocation3 [shape = 's32[1]{0}', space=sflag, size = 0x4, scoped, tag = 'scoped memory for tpu_custom_call.1']
    #allocation4 [shape = 's32[1]{0}', space=sflag, size = 0x4, scoped, tag = 'scoped memory for tpu_custom_call.1']
    #allocation5 [shape = 'u8[4096]{0}', space=vmem, size = 0x1000, scoped, tag = 'input window, operand 1, single buffered']
    #allocation6 [shape = 's32[1]{0}', space=sflag, size = 0x4, scoped, tag = 'scoped memory for tpu_custom_call.1']
    #allocation7 [shape = 'u8[65536]{0}', space=vmem, size = 0x10000, scoped, tag = 'input window, operand 2, single buffered']
    #allocation8 [shape = 'u8[65536]{0}', space=vmem, size = 0x10000, scoped, tag = 'input window, operand 4, single buffered']
    #allocation9 [shape = 's32[1]{0}', space=sflag, size = 0x4, scoped, tag = 'scoped memory for tpu_custom_call.1']
    #allocation10 [shape = 'u8[65536]{0}', space=vmem, size = 0x10000, scoped, tag = 'input window, operand 6, single buffered']
    #allocation11 [shape = 'u8[65536]{0}', space=vmem, size = 0x10000, scoped, tag = 'input window, operand 8, single buffered']
    #allocation12 [shape = 's32[1]{0}', space=sflag, size = 0x4, scoped, tag = 'scoped memory for tpu_custom_call.1']
    #allocation13 [shape = 'u8[4096]{0}', space=vmem, size = 0x1000, scoped, tag = 'output window, operand 0, single buffered']
    %15 = vsyncpa [#allocation3], 0
    %16 = vsyncpa [#allocation6], 0
    %17 = vsyncpa [#allocation9], 0
    %18 = vsyncpa [#allocation12], 0
    %19 = vsyncpa [#allocation4], 0
    // Predicated region
    $region2: #{tpu_custom_call.1} parent=1 // pred_check
      _
    $region3: #{tpu_custom_call.1} parent=1 // pred_check_branch
      %21 = sbr.rel (0) target = $region5
    $region4: #{tpu_custom_call.1} parent=1 // pred_region
      %s23 = ssub.s32 128, 128
      %24 = vsyncadd [#allocation3], %s23
      %s26 = sshll.u32 [#allocation2], 4
      %s27 = int_to_ptr.vmem [resolvable:$true] %s26
      %29 = dma.hbm_to_vmem [thread:$0]  %s0, 128, %s27, [#allocation3]
    $region5: #{tpu_custom_call.1} parent=1 // pred_fallthru
      _
    // Predicated region
    $region6: #{tpu_custom_call.1} parent=1 // pred_check
      _
    $region7: #{tpu_custom_call.1} parent=1 // pred_check_branch
      %31 = sbr.rel (0) target = $region9
    $region8: #{tpu_custom_call.1} parent=1 // pred_region
      %s33 = ssub.s32 128, 128
      %34 = vsyncadd [#allocation6], %s33
      %s36 = sshll.u32 [#allocation5], 4
      %s37 = int_to_ptr.vmem [resolvable:$true] %s36
      %39 = dma.hbm_to_vmem [thread:$0]  %s1, 128, %s37, [#allocation6]
    $region9: #{tpu_custom_call.1} parent=1 // pred_fallthru
      _
    // Predicated region
    $region10: #{tpu_custom_call.1} parent=1 // pred_check
      _
    $region11: #{tpu_custom_call.1} parent=1 // pred_check_branch
      %41 = sbr.rel (0) target = $region13
    $region12: #{tpu_custom_call.1} parent=1 // pred_region
      %s43 = ssub.s32 2048, 2048
      %44 = vsyncadd [#allocation6], %s43
      %s45 = sshll.u32 [#allocation7], 4
      %s46 = int_to_ptr.vmem [resolvable:$true] %s45
      %51 = dma.hbm_to_vmem [thread:$0]  %s2, 2048, %s46, [#allocation6], 128, 128, 8
    $region13: #{tpu_custom_call.1} parent=1 // pred_fallthru
      _
    // Predicated region
    $region14: #{tpu_custom_call.1} parent=1 // pred_check
      _
    $region15: #{tpu_custom_call.1} parent=1 // pred_check_branch
      %53 = sbr.rel (0) target = $region17
    $region16: #{tpu_custom_call.1} parent=1 // pred_region
      _
    $region17: #{tpu_custom_call.1} parent=1 // pred_fallthru
      _
    // Predicated region
    $region18: #{tpu_custom_call.1} parent=1 // pred_check
      _
    $region19: #{tpu_custom_call.1} parent=1 // pred_check_branch
      %55 = sbr.rel (0) target = $region21
    $region20: #{tpu_custom_call.1} parent=1 // pred_region
      %s57 = ssub.s32 2048, 2048
      %58 = vsyncadd [#allocation9], %s57
      %s59 = sshll.u32 [#allocation8], 4
      %s60 = int_to_ptr.vmem [resolvable:$true] %s59
      %65 = dma.hbm_to_vmem [thread:$0]  %s4, 2048, %s60, [#allocation9], 128, 128, 8
    $region21: #{tpu_custom_call.1} parent=1 // pred_fallthru
      _
    // Predicated region
    $region22: #{tpu_custom_call.1} parent=1 // pred_check
      _
    $region23: #{tpu_custom_call.1} parent=1 // pred_check_branch
      %67 = sbr.rel (0) target = $region25
    $region24: #{tpu_custom_call.1} parent=1 // pred_region
      _
    $region25: #{tpu_custom_call.1} parent=1 // pred_fallthru
      _
    // Predicated region
    $region26: #{tpu_custom_call.1} parent=1 // pred_check
      _
    $region27: #{tpu_custom_call.1} parent=1 // pred_check_branch
      %69 = sbr.rel (0) target = $region29
    $region28: #{tpu_custom_call.1} parent=1 // pred_region
      %s71 = ssub.s32 2048, 2048
      %72 = vsyncadd [#allocation9], %s71
      %s73 = sshll.u32 [#allocation10], 4
      %s74 = int_to_ptr.vmem [resolvable:$true] %s73
      %79 = dma.hbm_to_vmem [thread:$0]  %s6, 2048, %s74, [#allocation9], 128, 128, 8
    $region29: #{tpu_custom_call.1} parent=1 // pred_fallthru
      _
    // Predicated region
    $region30: #{tpu_custom_call.1} parent=1 // pred_check
      _
    $region31: #{tpu_custom_call.1} parent=1 // pred_check_branch
      %81 = sbr.rel (0) target = $region33
    $region32: #{tpu_custom_call.1} parent=1 // pred_region
      _
    $region33: #{tpu_custom_call.1} parent=1 // pred_fallthru
      _
    // Predicated region
    $region34: #{tpu_custom_call.1} parent=1 // pred_check
      _
    $region35: #{tpu_custom_call.1} parent=1 // pred_check_branch
      %83 = sbr.rel (0) target = $region37
    $region36: #{tpu_custom_call.1} parent=1 // pred_region
      %s85 = ssub.s32 2048, 2048
      %86 = vsyncadd [#allocation12], %s85
      %s87 = sshll.u32 [#allocation11], 4
      %s88 = int_to_ptr.vmem [resolvable:$true] %s87
      %93 = dma.hbm_to_vmem [thread:$0]  %s8, 2048, %s88, [#allocation12], 128, 128, 8
    $region37: #{tpu_custom_call.1} parent=1 // pred_fallthru
      _
    // Predicated region
    $region38: #{tpu_custom_call.1} parent=1 // pred_check
      _
    $region39: #{tpu_custom_call.1} parent=1 // pred_check_branch
      %95 = sbr.rel (0) target = $region41
    $region40: #{tpu_custom_call.1} parent=1 // pred_region
      _
    $region41: #{tpu_custom_call.1} parent=1 // pred_fallthru
      _
    // Predicated region
    $region42: #{tpu_custom_call.1} parent=1 // pred_check
      _
    $region43: #{tpu_custom_call.1} parent=1 // pred_check_branch
      %97 = sbr.rel (0) target = $region45
    $region44: #{tpu_custom_call.1} parent=1 // pred_region
      %98 = dma.done [#allocation3], 128
    $region45: #{tpu_custom_call.1} parent=1 // pred_fallthru
      _
    // Predicated region
    $region46: #{tpu_custom_call.1} parent=1 // pred_check
      _
    $region47: #{tpu_custom_call.1} parent=1 // pred_check_branch
      %100 = sbr.rel (0) target = $region49
    $region48: #{tpu_custom_call.1} parent=1 // pred_region
      %101 = dma.done [#allocation6], 128
    $region49: #{tpu_custom_call.1} parent=1 // pred_fallthru
      _
    // Predicated region
    $region50: #{tpu_custom_call.1} parent=1 // pred_check
      _
    $region51: #{tpu_custom_call.1} parent=1 // pred_check_branch
      %103 = sbr.rel (0) target = $region53
    $region52: #{tpu_custom_call.1} parent=1 // pred_region
      %104 = dma.done [#allocation6], 2048
    $region53: #{tpu_custom_call.1} parent=1 // pred_fallthru
      _
    // Predicated region
    $region54: #{tpu_custom_call.1} parent=1 // pred_check
      _
    $region55: #{tpu_custom_call.1} parent=1 // pred_check_branch
      %106 = sbr.rel (0) target = $region57
    $region56: #{tpu_custom_call.1} parent=1 // pred_region
      %107 = dma.done [#allocation9], 2048
    $region57: #{tpu_custom_call.1} parent=1 // pred_fallthru
      _
    // Predicated region
    $region58: #{tpu_custom_call.1} parent=1 // pred_check
      _
    $region59: #{tpu_custom_call.1} parent=1 // pred_check_branch
      %109 = sbr.rel (0) target = $region61
    $region60: #{tpu_custom_call.1} parent=1 // pred_region
      %110 = dma.done [#allocation9], 2048
    $region61: #{tpu_custom_call.1} parent=1 // pred_fallthru
      _
    // Predicated region
    $region62: #{tpu_custom_call.1} parent=1 // pred_check
      _
    $region63: #{tpu_custom_call.1} parent=1 // pred_check_branch
      %112 = sbr.rel (0) target = $region65
    $region64: #{tpu_custom_call.1} parent=1 // pred_region
      %113 = dma.done [#allocation12], 2048
    $region65: #{tpu_custom_call.1} parent=1 // pred_fallthru
      _
    %v114 = vld [vmem:[#allocation2] sm:$0xff]
    %v115 = vld [vmem:[#allocation7] sm:$0xff]
    %v116 = vld [vmem:[#allocation7 + $0x8] sm:$0xff]
    %v117 = vld [vmem:[#allocation7 + $0x10] sm:$0xff]
    %v118 = vld [vmem:[#allocation7 + $0x18] sm:$0xff]
    %v119 = vld [vmem:[#allocation7 + $0x20] sm:$0xff]
    %v120 = vld [vmem:[#allocation7 + $0x28] sm:$0xff]
    %v121 = vld [vmem:[#allocation7 + $0x30] sm:$0xff]
    %v122 = vld [vmem:[#allocation7 + $0x38] sm:$0xff]
    %v123 = vld [vmem:[#allocation7 + $0x40] sm:$0xff]
    %v124 = vld [vmem:[#allocation7 + $0x48] sm:$0xff]
    %v125 = vld [vmem:[#allocation7 + $0x50] sm:$0xff]
    %v126 = vld [vmem:[#allocation7 + $0x58] sm:$0xff]
    %v127 = vld [vmem:[#allocation7 + $0x60] sm:$0xff]
    %v128 = vld [vmem:[#allocation7 + $0x68] sm:$0xff]
    %v129 = vld [vmem:[#allocation7 + $0x70] sm:$0xff]
    %v130 = vld [vmem:[#allocation7 + $0x78] sm:$0xff]
    %v131 = vld [vmem:[%s3] sm:$0x1]
    %v133 = vlaneseq
    %v134 = vshrl.u32 %v133, 7
    %v135 = vsub.s32 0, %v134
    %v136 = vrot.slane %v131, %v135
    %138 = vmatprep.subr.mxu0 0.0
    %139 = vmatpush1.msra.mxu0 %v130
    %140 = vmatprep.subr.mxu0 0.0
    %141 = vmatpush1.msra.mxu0 %v129
    %142 = vmatprep.subr.mxu0 0.0
    %143 = vmatpush1.msra.mxu0 %v128
    %144 = vmatprep.subr.mxu0 0.0
    %145 = vmatpush1.msra.mxu0 %v127
    %146 = vmatprep.subr.mxu0 0.0
    %147 = vmatpush1.msra.mxu0 %v126
    %148 = vmatprep.subr.mxu0 0.0
    %149 = vmatpush1.msra.mxu0 %v125
    %150 = vmatprep.subr.mxu0 0.0
    %151 = vmatpush1.msra.mxu0 %v124
    %152 = vmatprep.subr.mxu0 0.0
    %153 = vmatpush1.msra.mxu0 %v123
    %154 = vmatprep.subr.mxu0 0.0
    %155 = vmatpush1.msra.mxu0 %v122
    %156 = vmatprep.subr.mxu0 0.0
    %157 = vmatpush1.msra.mxu0 %v121
    %158 = vmatprep.subr.mxu0 0.0
    %159 = vmatpush1.msra.mxu0 %v120
    %160 = vmatprep.subr.mxu0 0.0
    %161 = vmatpush1.msra.mxu0 %v119
    %162 = vmatprep.subr.mxu0 0.0
    %163 = vmatpush1.msra.mxu0 %v118
    %164 = vmatprep.subr.mxu0 0.0
    %165 = vmatpush1.msra.mxu0 %v117
    %166 = vmatprep.subr.mxu0 0.0
    %167 = vmatpush1.msra.mxu0 %v116
    %168 = vmatprep.subr.mxu0 0.0
    %169 = vmatpush1.msra.mxu0 %v115
    %170 = vmatprep.subr.mxu0 0.0
    %171 = vmatpush2.msra.mxu0 0.0
    %172 = vmatprep.subr.mxu0 0.0
    %173 = vmatpush2.msra.mxu0 0.0
    %174 = vmatprep.subr.mxu0 0.0
    %175 = vmatpush2.msra.mxu0 0.0
    %176 = vmatprep.subr.mxu0 0.0
    %177 = vmatpush2.msra.mxu0 0.0
    %178 = vmatprep.subr.mxu0 0.0
    %179 = vmatpush2.msra.mxu0 0.0
    %180 = vmatprep.subr.mxu0 0.0
    %181 = vmatpush2.msra.mxu0 0.0
    %182 = vmatprep.subr.mxu0 0.0
    %183 = vmatpush2.msra.mxu0 0.0
    %184 = vmatprep.subr.mxu0 0.0
    %185 = vmatpush2.msra.mxu0 0.0
    %186 = vmatprep.subr.mxu0 0.0
    %187 = vmatpush2.msra.mxu0 0.0
    %188 = vmatprep.subr.mxu0 0.0
    %189 = vmatpush2.msra.mxu0 0.0
    %190 = vmatprep.subr.mxu0 0.0
    %191 = vmatpush2.msra.mxu0 0.0
    %192 = vmatprep.subr.mxu0 0.0
    %193 = vmatpush2.msra.mxu0 0.0
    %194 = vmatprep.subr.mxu0 0.0
    %195 = vmatpush2.msra.mxu0 0.0
    %196 = vmatprep.subr.mxu0 0.0
    %197 = vmatpush2.msra.mxu0 0.0
    %198 = vmatprep.subr.mxu0 0.0
    %199 = vmatpush2.msra.mxu0 0.0
    %200 = vmatprep.subr.mxu0 0.0
    %201 = vmatpush2.msra.mxu0 0.0
    %202 = vmatprep.mubr.f32.mxu0 0.0
    %203 = vmatmul.mubr.f32.gmra.mxu0 %v114
    %v204 = vpop.f32.mrf.mxu0
    %v205 = vadd.f32 %v136, %v204
    %v206 = vpop.f32.mrf.mxu0
    %207 = vdwg.mxu0
    %v208 = vmax.f32 %v205, 0.0
    %v209 = vmin.f32 %v208, 6.0
    %v210 = vlaneseq
    %v211 = vshrl.u32 %v210, 7
    %vm212 = vcmp.lt.s32.totalorder %v211, 4
    %v213 = vsel %vm212, 1, 0
    %v214 = vcvt.s32.f32 %v213
    %v215 = vmul.f32 %v209, %v214
    %v216 = vrot.slane %v215, 4
    %v217 = vadd.f32 %v215, %v216
    %v218 = vrot.slane %v217, 2
    %v219 = vadd.f32 %v217, %v218
    %v220 = vrot.slane %v219, 1
    %v221 = vadd.f32 %v219, %v220
    %v222 = vmul.f32 %v221, 0.25
    %v223 = vsub.f32 %v209, %v222
    %v224 = vmul.f32 %v223, %v223
    %v225 = vmul.f32 %v224, %v214
    %v226 = vrot.slane %v225, 4
    %v227 = vadd.f32 %v225, %v226
    %v228 = vrot.slane %v227, 2
    %v229 = vadd.f32 %v227, %v228
    %v230 = vrot.slane %v229, 1
    %v231 = vadd.f32 %v229, %v230
    %v232 = vmul.f32 %v231, 0.25
    %v233 = vadd.f32 %v232, 1e-05
    %v234 = vrsqrt.pop %v233
    %v235 = vmul.f32 %v223, %v234
    %v236 = vld [vmem:[#allocation8] sm:$0xff]
    %v237 = vld [vmem:[#allocation8 + $0x8] sm:$0xff]
    %v238 = vld [vmem:[#allocation8 + $0x10] sm:$0xff]
    %v239 = vld [vmem:[#allocation8 + $0x18] sm:$0xff]
    %v240 = vld [vmem:[#allocation8 + $0x20] sm:$0xff]
    %v241 = vld [vmem:[#allocation8 + $0x28] sm:$0xff]
    %v242 = vld [vmem:[#allocation8 + $0x30] sm:$0xff]
    %v243 = vld [vmem:[#allocation8 + $0x38] sm:$0xff]
    %v244 = vld [vmem:[#allocation8 + $0x40] sm:$0xff]
    %v245 = vld [vmem:[#allocation8 + $0x48] sm:$0xff]
    %v246 = vld [vmem:[#allocation8 + $0x50] sm:$0xff]
    %v247 = vld [vmem:[#allocation8 + $0x58] sm:$0xff]
    %v248 = vld [vmem:[#allocation8 + $0x60] sm:$0xff]
    %v249 = vld [vmem:[#allocation8 + $0x68] sm:$0xff]
    %v250 = vld [vmem:[#allocation8 + $0x70] sm:$0xff]
    %v251 = vld [vmem:[#allocation8 + $0x78] sm:$0xff]
    %v252 = vld [vmem:[%s5] sm:$0x1]
    %v254 = vlaneseq
    %v255 = vshrl.u32 %v254, 7
    %v256 = vsub.s32 0, %v255
    %v257 = vrot.slane %v252, %v256
    %259 = vmatprep.subr.mxu0 0.0
    %260 = vmatpush1.msra.mxu0 %v251
    %261 = vmatprep.subr.mxu0 0.0
    %262 = vmatpush1.msra.mxu0 %v250
    %263 = vmatprep.subr.mxu0 0.0
    %264 = vmatpush1.msra.mxu0 %v249
    %265 = vmatprep.subr.mxu0 0.0
    %266 = vmatpush1.msra.mxu0 %v248
    %267 = vmatprep.subr.mxu0 0.0
    %268 = vmatpush1.msra.mxu0 %v247
    %269 = vmatprep.subr.mxu0 0.0
    %270 = vmatpush1.msra.mxu0 %v246
    %271 = vmatprep.subr.mxu0 0.0
    %272 = vmatpush1.msra.mxu0 %v245
    %273 = vmatprep.subr.mxu0 0.0
    %274 = vmatpush1.msra.mxu0 %v244
    %275 = vmatprep.subr.mxu0 0.0
    %276 = vmatpush1.msra.mxu0 %v243
    %277 = vmatprep.subr.mxu0 0.0
    %278 = vmatpush1.msra.mxu0 %v242
    %279 = vmatprep.subr.mxu0 0.0
    %280 = vmatpush1.msra.mxu0 %v241
    %281 = vmatprep.subr.mxu0 0.0
    %282 = vmatpush1.msra.mxu0 %v240
    %283 = vmatprep.subr.mxu0 0.0
    %284 = vmatpush1.msra.mxu0 %v239
    %285 = vmatprep.subr.mxu0 0.0
    %286 = vmatpush1.msra.mxu0 %v238
    %287 = vmatprep.subr.mxu0 0.0
    %288 = vmatpush1.msra.mxu0 %v237
    %289 = vmatprep.subr.mxu0 0.0
    %290 = vmatpush1.msra.mxu0 %v236
    %291 = vmatprep.subr.mxu0 0.0
    %292 = vmatpush2.msra.mxu0 0.0
    %293 = vmatprep.subr.mxu0 0.0
    %294 = vmatpush2.msra.mxu0 0.0
    %295 = vmatprep.subr.mxu0 0.0
    %296 = vmatpush2.msra.mxu0 0.0
    %297 = vmatprep.subr.mxu0 0.0
    %298 = vmatpush2.msra.mxu0 0.0
    %299 = vmatprep.subr.mxu0 0.0
    %300 = vmatpush2.msra.mxu0 0.0
    %301 = vmatprep.subr.mxu0 0.0
    %302 = vmatpush2.msra.mxu0 0.0
    %303 = vmatprep.subr.mxu0 0.0
    %304 = vmatpush2.msra.mxu0 0.0
    %305 = vmatprep.subr.mxu0 0.0
    %306 = vmatpush2.msra.mxu0 0.0
    %307 = vmatprep.subr.mxu0 0.0
    %308 = vmatpush2.msra.mxu0 0.0
    %309 = vmatprep.subr.mxu0 0.0
    %310 = vmatpush2.msra.mxu0 0.0
    %311 = vmatprep.subr.mxu0 0.0
    %312 = vmatpush2.msra.mxu0 0.0
    %313 = vmatprep.subr.mxu0 0.0
    %314 = vmatpush2.msra.mxu0 0.0
    %315 = vmatprep.subr.mxu0 0.0
    %316 = vmatpush2.msra.mxu0 0.0
    %317 = vmatprep.subr.mxu0 0.0
    %318 = vmatpush2.msra.mxu0 0.0
    %319 = vmatprep.subr.mxu0 0.0
    %320 = vmatpush2.msra.mxu0 0.0
    %321 = vmatprep.subr.mxu0 0.0
    %322 = vmatpush2.msra.mxu0 0.0
    %323 = vmatprep.mubr.f32.mxu0 0.0
    %324 = vmatmul.mubr.f32.gmra.mxu0 %v235
    %v325 = vpop.f32.mrf.mxu0
    %v326 = vadd.f32 %v257, %v325
    %v327 = vpop.f32.mrf.mxu0
    %328 = vdwg.mxu0
    %v329 = vmax.f32 %v326, 0.0
    %v330 = vmin.f32 %v329, 6.0
    %v331 = vld [vmem:[#allocation10] sm:$0xff]
    %v332 = vld [vmem:[#allocation10 + $0x8] sm:$0xff]
    %v333 = vld [vmem:[#allocation10 + $0x10] sm:$0xff]
    %v334 = vld [vmem:[#allocation10 + $0x18] sm:$0xff]
    %v335 = vld [vmem:[#allocation10 + $0x20] sm:$0xff]
    %v336 = vld [vmem:[#allocation10 + $0x28] sm:$0xff]
    %v337 = vld [vmem:[#allocation10 + $0x30] sm:$0xff]
    %v338 = vld [vmem:[#allocation10 + $0x38] sm:$0xff]
    %v339 = vld [vmem:[#allocation10 + $0x40] sm:$0xff]
    %v340 = vld [vmem:[#allocation10 + $0x48] sm:$0xff]
    %v341 = vld [vmem:[#allocation10 + $0x50] sm:$0xff]
    %v342 = vld [vmem:[#allocation10 + $0x58] sm:$0xff]
    %v343 = vld [vmem:[#allocation10 + $0x60] sm:$0xff]
    %v344 = vld [vmem:[#allocation10 + $0x68] sm:$0xff]
    %v345 = vld [vmem:[#allocation10 + $0x70] sm:$0xff]
    %v346 = vld [vmem:[#allocation10 + $0x78] sm:$0xff]
    %v347 = vld [vmem:[%s7] sm:$0x1]
    %v349 = vlaneseq
    %v350 = vshrl.u32 %v349, 7
    %v351 = vsub.s32 0, %v350
    %v352 = vrot.slane %v347, %v351
    %354 = vmatprep.subr.mxu0 0.0
    %355 = vmatpush1.msra.mxu0 %v346
    %356 = vmatprep.subr.mxu0 0.0
    %357 = vmatpush1.msra.mxu0 %v345
    %358 = vmatprep.subr.mxu0 0.0
    %359 = vmatpush1.msra.mxu0 %v344
    %360 = vmatprep.subr.mxu0 0.0
    %361 = vmatpush1.msra.mxu0 %v343
    %362 = vmatprep.subr.mxu0 0.0
    %363 = vmatpush1.msra.mxu0 %v342
    %364 = vmatprep.subr.mxu0 0.0
    %365 = vmatpush1.msra.mxu0 %v341
    %366 = vmatprep.subr.mxu0 0.0
    %367 = vmatpush1.msra.mxu0 %v340
    %368 = vmatprep.subr.mxu0 0.0
    %369 = vmatpush1.msra.mxu0 %v339
    %370 = vmatprep.subr.mxu0 0.0
    %371 = vmatpush1.msra.mxu0 %v338
    %372 = vmatprep.subr.mxu0 0.0
    %373 = vmatpush1.msra.mxu0 %v337
    %374 = vmatprep.subr.mxu0 0.0
    %375 = vmatpush1.msra.mxu0 %v336
    %376 = vmatprep.subr.mxu0 0.0
    %377 = vmatpush1.msra.mxu0 %v335
    %378 = vmatprep.subr.mxu0 0.0
    %379 = vmatpush1.msra.mxu0 %v334
    %380 = vmatprep.subr.mxu0 0.0
    %381 = vmatpush1.msra.mxu0 %v333
    %382 = vmatprep.subr.mxu0 0.0
    %383 = vmatpush1.msra.mxu0 %v332
    %384 = vmatprep.subr.mxu0 0.0
    %385 = vmatpush1.msra.mxu0 %v331
    %386 = vmatprep.subr.mxu0 0.0
    %387 = vmatpush2.msra.mxu0 0.0
    %388 = vmatprep.subr.mxu0 0.0
    %389 = vmatpush2.msra.mxu0 0.0
    %390 = vmatprep.subr.mxu0 0.0
    %391 = vmatpush2.msra.mxu0 0.0
    %392 = vmatprep.subr.mxu0 0.0
    %393 = vmatpush2.msra.mxu0 0.0
    %394 = vmatprep.subr.mxu0 0.0
    %395 = vmatpush2.msra.mxu0 0.0
    %396 = vmatprep.subr.mxu0 0.0
    %397 = vmatpush2.msra.mxu0 0.0
    %398 = vmatprep.subr.mxu0 0.0
    %399 = vmatpush2.msra.mxu0 0.0
    %400 = vmatprep.subr.mxu0 0.0
    %401 = vmatpush2.msra.mxu0 0.0
    %402 = vmatprep.subr.mxu0 0.0
    %403 = vmatpush2.msra.mxu0 0.0
    %404 = vmatprep.subr.mxu0 0.0
    %405 = vmatpush2.msra.mxu0 0.0
    %406 = vmatprep.subr.mxu0 0.0
    %407 = vmatpush2.msra.mxu0 0.0
    %408 = vmatprep.subr.mxu0 0.0
    %409 = vmatpush2.msra.mxu0 0.0
    %410 = vmatprep.subr.mxu0 0.0
    %411 = vmatpush2.msra.mxu0 0.0
    %412 = vmatprep.subr.mxu0 0.0
    %413 = vmatpush2.msra.mxu0 0.0
    %414 = vmatprep.subr.mxu0 0.0
    %415 = vmatpush2.msra.mxu0 0.0
    %416 = vmatprep.subr.mxu0 0.0
    %417 = vmatpush2.msra.mxu0 0.0
    %418 = vmatprep.mubr.f32.mxu0 0.0
    %419 = vmatmul.mubr.f32.gmra.mxu0 %v330
    %v420 = vpop.f32.mrf.mxu0
    %v421 = vadd.f32 %v352, %v420
    %v422 = vpop.f32.mrf.mxu0
    %423 = vdwg.mxu0
    %v424 = vmax.f32 %v421, 0.0
    %v425 = vmin.f32 %v424, 6.0
    %v426 = vld [vmem:[#allocation5] sm:$0xff]
    %vm427 = vcmp.ge.s32.totalorder %v426, 3006477107
    %v428 = vsel %vm427, 1.25, 0.0
    %v429 = vmul.f32 %v425, %v428
    %v430 = vld [vmem:[#allocation11] sm:$0xff]
    %v431 = vld [vmem:[#allocation11 + $0x8] sm:$0xff]
    %v432 = vld [vmem:[#allocation11 + $0x10] sm:$0xff]
    %v433 = vld [vmem:[#allocation11 + $0x18] sm:$0xff]
    %v434 = vld [vmem:[#allocation11 + $0x20] sm:$0xff]
    %v435 = vld [vmem:[#allocation11 + $0x28] sm:$0xff]
    %v436 = vld [vmem:[#allocation11 + $0x30] sm:$0xff]
    %v437 = vld [vmem:[#allocation11 + $0x38] sm:$0xff]
    %v438 = vld [vmem:[#allocation11 + $0x40] sm:$0xff]
    %v439 = vld [vmem:[#allocation11 + $0x48] sm:$0xff]
    %v440 = vld [vmem:[#allocation11 + $0x50] sm:$0xff]
    %v441 = vld [vmem:[#allocation11 + $0x58] sm:$0xff]
    %v442 = vld [vmem:[#allocation11 + $0x60] sm:$0xff]
    %v443 = vld [vmem:[#allocation11 + $0x68] sm:$0xff]
    %v444 = vld [vmem:[#allocation11 + $0x70] sm:$0xff]
    %v445 = vld [vmem:[#allocation11 + $0x78] sm:$0xff]
    %v446 = vld [vmem:[%s9] sm:$0x1]
    %v448 = vlaneseq
    %v449 = vshrl.u32 %v448, 7
    %v450 = vsub.s32 0, %v449
    %v451 = vrot.slane %v446, %v450
    %453 = vmatprep.subr.mxu0 0.0
    %454 = vmatpush1.msra.mxu0 %v445
    %455 = vmatprep.subr.mxu0 0.0
    %456 = vmatpush1.msra.mxu0 %v444
    %457 = vmatprep.subr.mxu0 0.0
    %458 = vmatpush1.msra.mxu0 %v443
    %459 = vmatprep.subr.mxu0 0.0
    %460 = vmatpush1.msra.mxu0 %v442
    %461 = vmatprep.subr.mxu0 0.0
    %462 = vmatpush1.msra.mxu0 %v441
    %463 = vmatprep.subr.mxu0 0.0
    %464 = vmatpush1.msra.mxu0 %v440
    %465 = vmatprep.subr.mxu0 0.0
    %466 = vmatpush1.msra.mxu0 %v439
    %467 = vmatprep.subr.mxu0 0.0
    %468 = vmatpush1.msra.mxu0 %v438
    %469 = vmatprep.subr.mxu0 0.0
    %470 = vmatpush1.msra.mxu0 %v437
    %471 = vmatprep.subr.mxu0 0.0
    %472 = vmatpush1.msra.mxu0 %v436
    %473 = vmatprep.subr.mxu0 0.0
    %474 = vmatpush1.msra.mxu0 %v435
    %475 = vmatprep.subr.mxu0 0.0
    %476 = vmatpush1.msra.mxu0 %v434
    %477 = vmatprep.subr.mxu0 0.0
    %478 = vmatpush1.msra.mxu0 %v433
    %479 = vmatprep.subr.mxu0 0.0
    %480 = vmatpush1.msra.mxu0 %v432
    %481 = vmatprep.subr.mxu0 0.0
    %482 = vmatpush1.msra.mxu0 %v431
    %483 = vmatprep.subr.mxu0 0.0
    %484 = vmatpush1.msra.mxu0 %v430
    %485 = vmatprep.subr.mxu0 0.0
    %486 = vmatpush2.msra.mxu0 0.0
    %487 = vmatprep.subr.mxu0 0.0
    %488 = vmatpush2.msra.mxu0 0.0
    %489 = vmatprep.subr.mxu0 0.0
    %490 = vmatpush2.msra.mxu0 0.0
    %491 = vmatprep.subr.mxu0 0.0
    %492 = vmatpush2.msra.mxu0 0.0
    %493 = vmatprep.subr.mxu0 0.0
    %494 = vmatpush2.msra.mxu0 0.0
    %495 = vmatprep.subr.mxu0 0.0
    %496 = vmatpush2.msra.mxu0 0.0
    %497 = vmatprep.subr.mxu0 0.0
    %498 = vmatpush2.msra.mxu0 0.0
    %499 = vmatprep.subr.mxu0 0.0
    %500 = vmatpush2.msra.mxu0 0.0
    %501 = vmatprep.subr.mxu0 0.0
    %502 = vmatpush2.msra.mxu0 0.0
    %503 = vmatprep.subr.mxu0 0.0
    %504 = vmatpush2.msra.mxu0 0.0
    %505 = vmatprep.subr.mxu0 0.0
    %506 = vmatpush2.msra.mxu0 0.0
    %507 = vmatprep.subr.mxu0 0.0
    %508 = vmatpush2.msra.mxu0 0.0
    %509 = vmatprep.subr.mxu0 0.0
    %510 = vmatpush2.msra.mxu0 0.0
    %511 = vmatprep.subr.mxu0 0.0
    %512 = vmatpush2.msra.mxu0 0.0
    %513 = vmatprep.subr.mxu0 0.0
    %514 = vmatpush2.msra.mxu0 0.0
    %515 = vmatprep.subr.mxu0 0.0
    %516 = vmatpush2.msra.mxu0 0.0
    %517 = vmatprep.mubr.f32.mxu0 0.0
    %518 = vmatmul.mubr.f32.gmra.mxu0 %v429
    %v519 = vpop.f32.mrf.mxu0
    %v520 = vadd.f32 %v451, %v519
    %v521 = vpop.f32.mrf.mxu0
    %522 = vdwg.mxu0
    %523 = vst [vmem:[#allocation13] sm:$0xff] %v520
    // Predicated region
    $region66: #{tpu_custom_call.1} parent=1 // pred_check
      _
    $region67: #{tpu_custom_call.1} parent=1 // pred_check_branch
      %525 = sbr.rel (0) target = $region69
    $region68: #{tpu_custom_call.1} parent=1 // pred_region
      %s527 = ssub.s32 128, 128
      %528 = vsyncadd [#allocation4], %s527
      %s530 = sshll.u32 [#allocation13], 4
      %s531 = int_to_ptr.vmem [resolvable:$true] %s530
      %533 = dma.vmem_to_hbm [thread:$0]  %s531, 128, %s10, [#allocation4]
    $region69: #{tpu_custom_call.1} parent=1 // pred_fallthru
      _
    // Predicated region
    $region70: #{tpu_custom_call.1} parent=1 // pred_check
      _
    $region71: #{tpu_custom_call.1} parent=1 // pred_check_branch
      %535 = sbr.rel (0) target = $region73
    $region72: #{tpu_custom_call.1} parent=1 // pred_region
      %536 = dma.done [#allocation4], 128
    $region73: #{tpu_custom_call.1} parent=1 // pred_fallthru
      _
    %537 = vsyncpa [#allocation3], 1
    %538 = vsyncpa [#allocation6], 1
    %539 = vsyncpa [#allocation9], 1
    %540 = vsyncpa [#allocation12], 1
    %541 = vsyncpa [#allocation4], 1

</llo_original>
